<compile_context>
chip_gen: v7x
topology: tpu7x:2x2x1
jax: 0.10.0
libtpu: 0.0.40
codegen_flags: <defaults>
</compile_context>

<pallas_src>
import functools

import numpy as np
import jax
import jax.numpy as jnp
from jax.experimental import pallas as pl
from jax.experimental.pallas import tpu as pltpu


# ----------------------------------------------------------------------------
# Pallas kernel: fused batched losses + 1x1 class conv + anomaly score
#                + masked (target == 0) batch reduction
# ----------------------------------------------------------------------------
def _loss_kernel(img_ref, rec_ref, mom_ref, cf_ref, cw_ref, tgt_ref, params_ref,
                 cls_ref, loss_ref, *, inv_hwl, kl_weight):
    logvar = params_ref[0]       # scalar nn.Parameter logvar (SMEM)
    class_bias = params_ref[1]   # class_conv bias (SMEM)

    # ---- NLL path: two reductions + scalar epilogue --------------------------
    img = img_ref[...]           # (B, C*H*W) lane-dense (768 = 6*128 lanes)
    rec = rec_ref[...]
    diff = img - rec
    s1 = jnp.sum(jnp.abs(diff), axis=-1, keepdims=True)       # (B, 1)
    s2 = jnp.sum(diff * diff, axis=-1, keepdims=True)         # (B, 1)
    n_pix = float(img.shape[-1])
    # TODO(synk): LPIPS() is a pretrained VGG perceptual net; replaced by a
    # per-sample MSE proxy (same (B,1,1,1)-broadcast semantics).  With that
    # proxy, sum(|diff| + p_loss) == s1 + s2, so the NLL collapses to:
    inv_var = jnp.exp(jnp.full((1, 1), -logvar, dtype=jnp.float32))  # EUP
    nll_sum = (s1 + s2) * inv_var + logvar * n_pix             # (B, 1)

    # ---- KL path: posterior.kl() = 0.5*sum(mu^2 + var - 1 - logvar) ----------
    mu = mom_ref[0]              # (B, Zc*hl*wl)
    lv = mom_ref[1]              # (B, Zc*hl*wl)
    kl = 0.5 * jnp.sum(mu * mu + jnp.exp(lv) - 1.0 - lv,
                       axis=-1, keepdims=True)                 # (B, 1)

    # ---- class_conv (1x1 over 768 ch) + anomaly score (topk == 0 path) -------
    # cf is channel-major flattened (B, CF*HWl); cw is the conv weight repeated
    # per spatial position, so the 1x1 conv + spatial mean is a single
    # elementwise multiply + cross-lane reduce (VPU/XLU, no MXU).
    cf = cf_ref[...]             # (B, CF*HWl) lane-dense (12288 = 96*128)
    cw = cw_ref[...]             # (1, CF*HWl)
    cls = jnp.sum(cf * cw, axis=-1, keepdims=True) * inv_hwl + class_bias
    cls_ref[...] = cls           # (B, 1) per-sample class score, written once

    # ---- fused masked batch reduction over samples with target == 0 ----------
    mask = jnp.where(tgt_ref[...] == 0,
                     jnp.float32(1.0), jnp.float32(0.0))       # (B, 1)
    n_idx = jnp.sum(mask, axis=0, keepdims=True)               # (1, 1)
    inv_n = 1.0 / n_idx
    wnll = jnp.sum(mask * nll_sum, axis=0, keepdims=True) * inv_n          # (1, 1)
    kl_loss = jnp.sum(mask * kl, axis=0, keepdims=True) * inv_n * kl_weight
    loss_ref[...] = jnp.concatenate([wnll, kl_loss], axis=-1)  # (1, 2)


def _fused_losses(img2, rec2, moments, cf2, cw_rep, target2, scalar_params,
                  *, hwl, kl_weight):
    B = img2.shape[0]
    kernel = functools.partial(_loss_kernel,
                               inv_hwl=1.0 / float(hwl),
                               kl_weight=float(kl_weight))
    return pl.pallas_call(
        kernel,
        out_shape=(jax.ShapeDtypeStruct((B, 1), jnp.float32),   # class_score
                   jax.ShapeDtypeStruct((1, 2), jnp.float32)),  # [wnll, kl]
        in_specs=[
            pl.BlockSpec(memory_space=pltpu.MemorySpace.VMEM),  # image (B, C*H*W)
            pl.BlockSpec(memory_space=pltpu.MemorySpace.VMEM),  # recon (B, C*H*W)
            pl.BlockSpec(memory_space=pltpu.MemorySpace.VMEM),  # [mu; logvar] (2,B,Zc*HWl)
            pl.BlockSpec(memory_space=pltpu.MemorySpace.VMEM),  # class feature (B, CF*HWl)
            pl.BlockSpec(memory_space=pltpu.MemorySpace.VMEM),  # repeated conv weight
            pl.BlockSpec(memory_space=pltpu.MemorySpace.VMEM),  # target (B, 1) int32
            pl.BlockSpec(memory_space=pltpu.MemorySpace.SMEM),  # [logvar, class bias]
        ],
        out_specs=(pl.BlockSpec(memory_space=pltpu.MemorySpace.VMEM),
                   pl.BlockSpec(memory_space=pltpu.MemorySpace.VMEM)),
    )(img2, rec2, moments, cf2, cw_rep, target2, scalar_params)


# ----------------------------------------------------------------------------
# Deterministic parameter init (shapes from SemiADNet.__init__)
# ----------------------------------------------------------------------------
def init_params(key, C=3, Zc=4, CF=768, domain_cnt=3):
    ks = jax.random.split(key, 8)
    p = {}
    p["logvar"] = jnp.zeros((), jnp.float32)                    # nn.Parameter(ones(())*0.0)
    p["class_conv_w"] = 0.02 * jax.random.normal(ks[0], (1, CF, 1, 1), jnp.float32)
    p["class_conv_b"] = jnp.zeros((1,), jnp.float32)
    # Unused in forward() but initialized to match __init__ shapes:
    p["domain_conv_w"] = 0.02 * jax.random.normal(ks[1], (1, 256, 1, 1), jnp.float32)
    p["domain_conv_b"] = jnp.zeros((1,), jnp.float32)
    p["domain_cls_v"] = 0.02 * jax.random.normal(ks[2], (domain_cnt, 64), jnp.float32)
    p["domain_cls_g"] = jnp.ones((domain_cnt, 1), jnp.float32)  # weight_g fixed to 1
    # TODO(synk): build_feature_extractor / AutoencoderKL architecture is external;
    # stand-in VAE: avgpool(4) -> 1x1-conv encoder (moments) -> mode -> 1x1-conv
    # decoder -> nearest upsample(4); class_mode() feature = 1x1 conv Zc -> 768.
    p["enc_w"] = 0.2 * jax.random.normal(ks[3], (2 * Zc, C), jnp.float32)
    p["enc_b"] = jnp.zeros((2 * Zc,), jnp.float32)
    p["dec_w"] = 0.2 * jax.random.normal(ks[4], (C, Zc), jnp.float32)
    p["dec_b"] = jnp.zeros((C,), jnp.float32)
    p["clsfeat_w"] = 0.2 * jax.random.normal(ks[5], (CF, Zc), jnp.float32)
    p["clsfeat_b"] = jnp.zeros((CF,), jnp.float32)
    return p


def vae_standin(p, image):
    """Deterministic stand-in for self.VAE(image) (plain-JAX glue)."""
    B, C, H, W = image.shape
    pooled = image.reshape(B, C, H // 4, 4, W // 4, 4).mean(axis=(3, 5))      # (B,C,4,4)
    moments = jnp.einsum("oc,bchw->bohw", p["enc_w"], pooled) \
        + p["enc_b"][None, :, None, None]
    Zc = moments.shape[1] // 2
    mean, logvar_lat = moments[:, :Zc], moments[:, Zc:]
    logvar_lat = jnp.clip(logvar_lat, -30.0, 20.0)
    z = mean                                                                  # posterior mode
    dec = jnp.einsum("oc,bchw->bohw", p["dec_w"], z) + p["dec_b"][None, :, None, None]
    recon = jnp.repeat(jnp.repeat(dec, 4, axis=2), 4, axis=3)                 # (B,C,16,16)
    class_feature = jnp.einsum("oc,bchw->bohw", p["clsfeat_w"], mean) \
        + p["clsfeat_b"][None, :, None, None]                                 # (B,768,4,4)
    return recon, mean, logvar_lat, class_feature


# ----------------------------------------------------------------------------
# SemiADNet.forward
# ----------------------------------------------------------------------------
def semiadnet_forward(p, image, domain_label, target, weights=None):
    del domain_label  # unused in the reference forward
    assert weights is None  # TODO(synk): `weights is not None` path not implemented
    B, C, H, W = image.shape
    recon, mean, logvar_lat, class_feature = vae_standin(p, image)
    Zc, hl, wl = mean.shape[1:]
    CF = class_feature.shape[1]
    HWl = hl * wl

    # lane-dense slabs for the single-step kernel
    img2 = image.reshape(B, C * H * W).astype(jnp.float32)
    rec2 = recon.reshape(B, C * H * W).astype(jnp.float32)
    moments = jnp.stack([mean.reshape(B, Zc * HWl),
                         logvar_lat.reshape(B, Zc * HWl)], axis=0)            # (2,B,Zc*HWl)
    cf2 = class_feature.reshape(B, CF * HWl).astype(jnp.float32)
    # 1x1-conv weight repeated per spatial position (channel-major flat order)
    cw_rep = jnp.repeat(p["class_conv_w"].reshape(CF), HWl).reshape(1, CF * HWl)
    scalar_params = jnp.stack([p["logvar"].astype(jnp.float32),
                               p["class_conv_b"][0].astype(jnp.float32)])
    target2 = target.reshape(B, 1).astype(jnp.int32)

    cls, loss = _fused_losses(img2, rec2, moments, cf2, cw_rep, target2,
                              scalar_params, hwl=HWl, kl_weight=1e-6)
    weighted_nll_loss = loss[0, 0]
    kl_loss = loss[0, 1]
    class_score = cls[:, 0]
    return (recon, weighted_nll_loss, kl_loss, class_score, None, None, None)


# ----------------------------------------------------------------------------
# Plain-JAX reference for validation
# ----------------------------------------------------------------------------
def reference_forward(p, image, target):
    recon, mean, lvl, cf = vae_standin(p, image)
    diff = image - recon
    p_loss = jnp.mean(diff * diff, axis=(1, 2, 3), keepdims=True)
    rec_loss = jnp.abs(diff) + p_loss
    nll = rec_loss / jnp.exp(p["logvar"]) + p["logvar"]
    nll_per = jnp.sum(nll, axis=(1, 2, 3))
    kl_per = 0.5 * jnp.sum(mean ** 2 + jnp.exp(lvl) - 1.0 - lvl, axis=(1, 2, 3))
    cls_map = jnp.einsum("oc,bchw->bohw", p["class_conv_w"].reshape(1, -1), cf) \
        + p["class_conv_b"][None, :, None, None]
    class_score = jnp.mean(cls_map.reshape(cls_map.shape[0], -1), axis=1)
    mask = target == 0
    n = jnp.sum(mask).astype(jnp.float32)
    wnll = jnp.sum(jnp.where(mask, nll_per, 0.0)) / n
    kl = jnp.sum(jnp.where(mask, kl_per, 0.0)) / n * 1e-6
    return recon, wnll, kl, class_score


if __name__ == "__main__":
    key = jax.random.PRNGKey(0)
    pkey, ikey = jax.random.split(key)
    params = init_params(pkey)

    B, C, H, W = 4, 3, 16, 16
    image = jax.random.normal(ikey, (B, C, H, W), jnp.float32)
    target = jnp.array([0, 1, 0, 1], jnp.int32)          # idx = samples with target == 0
    domain_label = jnp.array([0, 1, 2, 0], jnp.int32)

    outs = semiadnet_forward(params, image, domain_label, target)
    jax.block_until_ready(outs)

    ref_recon, ref_wnll, ref_kl, ref_cls = reference_forward(params, image, target)
    np.testing.assert_allclose(np.asarray(outs[0]), np.asarray(ref_recon),
                               rtol=1e-5, atol=1e-5)
    np.testing.assert_allclose(np.asarray(outs[1]), np.asarray(ref_wnll),
                               rtol=2e-3, atol=1e-4)
    np.testing.assert_allclose(np.asarray(outs[2]), np.asarray(ref_kl),
                               rtol=2e-3, atol=1e-8)
    np.testing.assert_allclose(np.asarray(outs[3]), np.asarray(ref_cls),
                               rtol=2e-3, atol=1e-4)
    print("KERNEL_OK")
</pallas_src>

<mosaic_0001>
module attributes {stable_mosaic.version = 11 : i64} {
  func.func @_loss_kernel(%arg0: memref<4x768xf32, #tpu.memory_space<vmem>>, %arg1: memref<4x768xf32, #tpu.memory_space<vmem>>, %arg2: memref<2x4x64xf32, #tpu.memory_space<vmem>>, %arg3: memref<4x12288xf32, #tpu.memory_space<vmem>>, %arg4: memref<1x12288xf32, #tpu.memory_space<vmem>>, %arg5: memref<4x1xi32, #tpu.memory_space<vmem>>, %arg6: memref<2xf32, #tpu.memory_space<smem>>, %arg7: memref<4x1xf32, #tpu.memory_space<vmem>>, %arg8: memref<1x2xf32, #tpu.memory_space<vmem>>) attributes {dimension_semantics = [], scalar_prefetch = 0 : i64, scratch_operands = 0 : i64, tpu.core_type = #tpu.core_type<tc>} {
    %c0 = arith.constant 0 : index
    %0 = memref.load %arg6[%c0] : memref<2xf32, #tpu.memory_space<smem>>
    %c1 = arith.constant 1 : index
    %1 = memref.load %arg6[%c1] : memref<2xf32, #tpu.memory_space<smem>>
    %c0_0 = arith.constant 0 : index
    %c0_1 = arith.constant 0 : index
    %2 = vector.load %arg0[%c0_0, %c0_1] : memref<4x768xf32, #tpu.memory_space<vmem>>, vector<4x768xf32>
    %c0_2 = arith.constant 0 : index
    %c0_3 = arith.constant 0 : index
    %3 = vector.load %arg1[%c0_2, %c0_3] : memref<4x768xf32, #tpu.memory_space<vmem>>, vector<4x768xf32>
    %4 = arith.subf %2, %3 : vector<4x768xf32>
    %5 = math.absf %4 : vector<4x768xf32>
    %cst = arith.constant dense<0.000000e+00> : vector<4xf32>
    %6 = vector.multi_reduction <add>, %5, %cst [1] : vector<4x768xf32> to vector<4xf32>
    %7 = vector.shape_cast %6 : vector<4xf32> to vector<4x1xf32>
    %8 = arith.mulf %4, %4 : vector<4x768xf32>
    %cst_4 = arith.constant dense<0.000000e+00> : vector<4xf32>
    %9 = vector.multi_reduction <add>, %8, %cst_4 [1] : vector<4x768xf32> to vector<4xf32>
    %10 = vector.shape_cast %9 : vector<4xf32> to vector<4x1xf32>
    %cst_5 = arith.constant 0.000000e+00 : f32
    %11 = arith.subf %cst_5, %0 : f32
    %12 = vector.broadcast %11 : f32 to vector<1x1xf32>
    %13 = math.exp %12 : vector<1x1xf32>
    %14 = arith.addf %7, %10 : vector<4x1xf32>
    %15 = vector.broadcast %13 : vector<1x1xf32> to vector<4x1xf32>
    %16 = arith.mulf %14, %15 : vector<4x1xf32>
    %cst_6 = arith.constant 7.680000e+02 : f32
    %17 = arith.mulf %0, %cst_6 : f32
    %18 = vector.broadcast %17 : f32 to vector<4x1xf32>
    %19 = arith.addf %16, %18 : vector<4x1xf32>
    %c0_7 = arith.constant 0 : index
    %c0_8 = arith.constant 0 : index
    %c0_9 = arith.constant 0 : index
    %20 = vector.load %arg2[%c0_7, %c0_8, %c0_9] : memref<2x4x64xf32, #tpu.memory_space<vmem>>, vector<1x4x64xf32>
    %21 = vector.shape_cast %20 : vector<1x4x64xf32> to vector<4x64xf32>
    %c1_10 = arith.constant 1 : index
    %c0_11 = arith.constant 0 : index
    %c0_12 = arith.constant 0 : index
    %22 = vector.load %arg2[%c1_10, %c0_11, %c0_12] : memref<2x4x64xf32, #tpu.memory_space<vmem>>, vector<1x4x64xf32>
    %23 = vector.shape_cast %22 : vector<1x4x64xf32> to vector<4x64xf32>
    %24 = arith.mulf %21, %21 : vector<4x64xf32>
    %25 = math.exp %23 : vector<4x64xf32>
    %26 = arith.addf %24, %25 : vector<4x64xf32>
    %cst_13 = arith.constant 1.000000e+00 : f32
    %27 = vector.broadcast %cst_13 : f32 to vector<4x64xf32>
    %28 = arith.subf %26, %27 : vector<4x64xf32>
    %29 = arith.subf %28, %23 : vector<4x64xf32>
    %cst_14 = arith.constant dense<0.000000e+00> : vector<4xf32>
    %30 = vector.multi_reduction <add>, %29, %cst_14 [1] : vector<4x64xf32> to vector<4xf32>
    %31 = vector.shape_cast %30 : vector<4xf32> to vector<4x1xf32>
    %cst_15 = arith.constant 5.000000e-01 : f32
    %32 = vector.broadcast %cst_15 : f32 to vector<4x1xf32>
    %33 = arith.mulf %32, %31 : vector<4x1xf32>
    %c0_16 = arith.constant 0 : index
    %c0_17 = arith.constant 0 : index
    %34 = vector.load %arg3[%c0_16, %c0_17] : memref<4x12288xf32, #tpu.memory_space<vmem>>, vector<4x12288xf32>
    %c0_18 = arith.constant 0 : index
    %c0_19 = arith.constant 0 : index
    %35 = vector.load %arg4[%c0_18, %c0_19] : memref<1x12288xf32, #tpu.memory_space<vmem>>, vector<1x12288xf32>
    %36 = vector.broadcast %35 : vector<1x12288xf32> to vector<4x12288xf32>
    %37 = arith.mulf %34, %36 : vector<4x12288xf32>
    %cst_20 = arith.constant dense<0.000000e+00> : vector<4xf32>
    %38 = vector.multi_reduction <add>, %37, %cst_20 [1] : vector<4x12288xf32> to vector<4xf32>
    %39 = vector.shape_cast %38 : vector<4xf32> to vector<4x1xf32>
    %cst_21 = arith.constant 6.250000e-02 : f32
    %40 = vector.broadcast %cst_21 : f32 to vector<4x1xf32>
    %41 = arith.mulf %39, %40 : vector<4x1xf32>
    %42 = vector.broadcast %1 : f32 to vector<4x1xf32>
    %43 = arith.addf %41, %42 : vector<4x1xf32>
    %c0_22 = arith.constant 0 : index
    %c0_23 = arith.constant 0 : index
    %44 = vector.load %arg7[%c0_22, %c0_23] : memref<4x1xf32, #tpu.memory_space<vmem>>, vector<4x1xf32>
    tpu.vector_store %arg7[%c0_22, %c0_23], %43 {strides = array<i32>} : memref<4x1xf32, #tpu.memory_space<vmem>>, vector<4x1xf32>,
    %c0_24 = arith.constant 0 : index
    %c0_25 = arith.constant 0 : index
    %45 = vector.load %arg5[%c0_24, %c0_25] : memref<4x1xi32, #tpu.memory_space<vmem>>, vector<4x1xi32>
    %c0_i32 = arith.constant 0 : i32
    %46 = vector.broadcast %c0_i32 : i32 to vector<4x1xi32>
    %47 = arith.cmpi eq, %45, %46 : vector<4x1xi32>
    %cst_26 = arith.constant 1.000000e+00 : f32
    %cst_27 = arith.constant 0.000000e+00 : f32
    %48 = vector.broadcast %cst_26 : f32 to vector<4x1xf32>
    %49 = vector.broadcast %cst_27 : f32 to vector<4x1xf32>
    %50 = arith.select %47, %48, %49 : vector<4x1xi1>, vector<4x1xf32>
    %cst_28 = arith.constant dense<0.000000e+00> : vector<1xf32>
    %51 = vector.multi_reduction <add>, %50, %cst_28 [0] : vector<4x1xf32> to vector<1xf32>
    %52 = vector.shape_cast %51 : vector<1xf32> to vector<1x1xf32>
    %cst_29 = arith.constant 1.000000e+00 : f32
    %53 = vector.broadcast %cst_29 : f32 to vector<1x1xf32>
    %54 = arith.divf %53, %52 : vector<1x1xf32>
    %55 = arith.mulf %50, %19 : vector<4x1xf32>
    %cst_30 = arith.constant dense<0.000000e+00> : vector<1xf32>
    %56 = vector.multi_reduction <add>, %55, %cst_30 [0] : vector<4x1xf32> to vector<1xf32>
    %57 = vector.shape_cast %56 : vector<1xf32> to vector<1x1xf32>
    %58 = arith.mulf %57, %54 : vector<1x1xf32>
    %59 = arith.mulf %50, %33 : vector<4x1xf32>
    %cst_31 = arith.constant dense<0.000000e+00> : vector<1xf32>
    %60 = vector.multi_reduction <add>, %59, %cst_31 [0] : vector<4x1xf32> to vector<1xf32>
    %61 = vector.shape_cast %60 : vector<1xf32> to vector<1x1xf32>
    %62 = arith.mulf %61, %54 : vector<1x1xf32>
    %cst_32 = arith.constant 9.99999997E-7 : f32
    %63 = vector.broadcast %cst_32 : f32 to vector<1x1xf32>
    %64 = arith.mulf %62, %63 : vector<1x1xf32>
    %65 = tpu.concatenate %58, %64 in 1 : vector<1x1xf32>, vector<1x1xf32> -> vector<1x2xf32>
    %c0_33 = arith.constant 0 : index
    %c0_34 = arith.constant 0 : index
    %66 = vector.load %arg8[%c0_33, %c0_34] : memref<1x2xf32, #tpu.memory_space<vmem>>, vector<1x2xf32>
    tpu.vector_store %arg8[%c0_33, %c0_34], %65 {strides = array<i32>} : memref<1x2xf32, #tpu.memory_space<vmem>>, vector<1x2xf32>,
    return
  }
}

</mosaic_0001>

<llo_original>
// kernel: tpu_custom_call.1
$region0: #{tpu_custom_call.1}
  #allocation0 [shape = 'u32[]', space=smem, size = 0x4, offset = 0x4, fixed_abs, tag = 'smem constant byte address 0x4 - core index']
  #allocation1 [shape = 'u32[144,128]{1,0:T(1,128)}', space=vmem, size = 0x12000, scoped, tag = 'internal scratch']
  %s0 = inlined_call_operand.hbm [shape: f32[4,768], index: 0, kind: input, shape index: {}]
  %s1 = inlined_call_operand.hbm [shape: f32[4,768], index: 1, kind: input, shape index: {}]
  %s2 = inlined_call_operand.vmem [shape: f32[2,4,64], index: 2, kind: input, shape index: {}]
  %s3 = inlined_call_operand.hbm [shape: f32[4,12288], index: 3, kind: input, shape index: {}]
  %s4 = inlined_call_operand.hbm [shape: f32[1,12288], index: 4, kind: input, shape index: {}]
  %s5 = inlined_call_operand.vmem [shape: s32[4,1], index: 5, kind: input, shape index: {}]
  %s6 = inlined_call_operand.vmem [shape: f32[2], index: 6, kind: input, shape index: {}]
  %s7 = inlined_call_operand.vmem [shape: f32[4,1], index: 7, kind: output, shape index: {0}]
  %s8 = inlined_call_operand.hbm [shape: f32[1,2], index: 8, kind: output, shape index: {1}]
  %9 = xla_tuple %s7, %s8
  %s10 = sld [smem:[#allocation0]]
  $region66: #{tpu_custom_call.1} parent=0
    _
  %s12 = ssub.s32 1, %s10
  %s13 = scalar_select 0, %s12, %s10
  $region1: #{tpu_custom_call.1} parent=0
    #allocation2 [shape = 'u8[12288]{0}', space=vmem, size = 0x3000, scoped, tag = 'input window, operand 0, single buffered']
    #allocation3 [shape = 's32[1]{0}', space=sflag, size = 0x4, scoped, tag = 'scoped memory for tpu_custom_call.1']
    #allocation4 [shape = 's32[1]{0}', space=sflag, size = 0x4, scoped, tag = 'scoped memory for tpu_custom_call.1']
    #allocation5 [shape = 's32[1]{0}', space=sflag, size = 0x4, scoped, tag = 'scoped memory for tpu_custom_call.1']
    #allocation6 [shape = 'u8[12288]{0}', space=vmem, size = 0x3000, scoped, tag = 'input window, operand 1, single buffered']
    #allocation7 [shape = 's32[1]{0}', space=sflag, size = 0x4, scoped, tag = 'scoped memory for tpu_custom_call.1']
    #allocation8 [shape = 'u8[196608]{0}', space=vmem, size = 0x30000, scoped, tag = 'input window, operand 3, single buffered']
    #allocation9 [shape = 'u8[49152]{0}', space=vmem, size = 0xc000, scoped, tag = 'input window, operand 4, single buffered']
    #allocation10 [shape = 's32[1]{0}', space=sflag, size = 0x4, scoped, tag = 'scoped memory for tpu_custom_call.1']
    #allocation11 [shape = 'u8[512]{0}', space=smem, size = 0x200, scoped, tag = 'input window, operand 6, single buffered']
    #allocation12 [shape = 'u8[512]{0}', space=vmem, size = 0x400, scoped, tag = 'output window, operand 1, single buffered']
    %14 = vsyncpa [#allocation3], 0
    %15 = vsyncpa [#allocation7], 0
    %16 = vsyncpa [#allocation10], 0
    %17 = vsyncpa [#allocation5], 0
    %18 = vsyncpa [#allocation4], 0
    // Predicated region
    $region2: #{tpu_custom_call.1} parent=1 // pred_check
      _
    $region3: #{tpu_custom_call.1} parent=1 // pred_check_branch
      %20 = sbr.rel (0) target = $region5
    $region4: #{tpu_custom_call.1} parent=1 // pred_region
      %s22 = ssub.s32 384, 384
      %23 = vsyncadd [#allocation3], %s22
      %s25 = sshll.u32 [#allocation2], 4
      %s26 = int_to_ptr.vmem [resolvable:$true] %s25
      %28 = dma.hbm_to_vmem [thread:$0]  %s0, 384, %s26, [#allocation3]
    $region5: #{tpu_custom_call.1} parent=1 // pred_fallthru
      _
    // Predicated region
    $region6: #{tpu_custom_call.1} parent=1 // pred_check
      _
    $region7: #{tpu_custom_call.1} parent=1 // pred_check_branch
      %30 = sbr.rel (0) target = $region9
    $region8: #{tpu_custom_call.1} parent=1 // pred_region
      %s32 = ssub.s32 384, 384
      %33 = vsyncadd [#allocation7], %s32
      %s35 = sshll.u32 [#allocation6], 4
      %s36 = int_to_ptr.vmem [resolvable:$true] %s35
      %38 = dma.hbm_to_vmem [thread:$0]  %s1, 384, %s36, [#allocation7]
    $region9: #{tpu_custom_call.1} parent=1 // pred_fallthru
      _
    // Predicated region
    $region10: #{tpu_custom_call.1} parent=1 // pred_check
      _
    $region11: #{tpu_custom_call.1} parent=1 // pred_check_branch
      %40 = sbr.rel (0) target = $region13
    $region12: #{tpu_custom_call.1} parent=1 // pred_region
      _
    $region13: #{tpu_custom_call.1} parent=1 // pred_fallthru
      _
    // Predicated region
    $region14: #{tpu_custom_call.1} parent=1 // pred_check
      _
    $region15: #{tpu_custom_call.1} parent=1 // pred_check_branch
      %42 = sbr.rel (0) target = $region17
    $region16: #{tpu_custom_call.1} parent=1 // pred_region
      %s44 = ssub.s32 6144, 6144
      %45 = vsyncadd [#allocation7], %s44
      %s47 = sshll.u32 [#allocation8], 4
      %s48 = int_to_ptr.vmem [resolvable:$true] %s47
      %50 = dma.hbm_to_vmem [thread:$0]  %s3, 6144, %s48, [#allocation7]
    $region17: #{tpu_custom_call.1} parent=1 // pred_fallthru
      _
    // Predicated region
    $region18: #{tpu_custom_call.1} parent=1 // pred_check
      _
    $region19: #{tpu_custom_call.1} parent=1 // pred_check_branch
      %52 = sbr.rel (0) target = $region21
    $region20: #{tpu_custom_call.1} parent=1 // pred_region
      %s54 = ssub.s32 1536, 1536
      %55 = vsyncadd [#allocation10], %s54
      %s57 = sshll.u32 [#allocation9], 4
      %s58 = int_to_ptr.vmem [resolvable:$true] %s57
      %60 = dma.hbm_to_vmem [thread:$0]  %s4, 1536, %s58, [#allocation10]
    $region21: #{tpu_custom_call.1} parent=1 // pred_fallthru
      _
    // Predicated region
    $region22: #{tpu_custom_call.1} parent=1 // pred_check
      _
    $region23: #{tpu_custom_call.1} parent=1 // pred_check_branch
      %62 = sbr.rel (0) target = $region25
    $region24: #{tpu_custom_call.1} parent=1 // pred_region
      _
    $region25: #{tpu_custom_call.1} parent=1 // pred_fallthru
      _
    // Predicated region
    $region26: #{tpu_custom_call.1} parent=1 // pred_check
      _
    $region27: #{tpu_custom_call.1} parent=1 // pred_check_branch
      %64 = sbr.rel (0) target = $region29
    $region28: #{tpu_custom_call.1} parent=1 // pred_region
      %s66 = ssub.s32 16, 16
      %67 = vsyncadd [#allocation5], %s66
      %s69 = sshll.u32 %s6, 4
      %s70 = int_to_ptr.vmem [resolvable:$true] %s69
      %72 = dma.vmem_to_smem %s70, 16, [#allocation11], [#allocation5]
    $region29: #{tpu_custom_call.1} parent=1 // pred_fallthru
      _
    // Predicated region
    $region30: #{tpu_custom_call.1} parent=1 // pred_check
      _
    $region31: #{tpu_custom_call.1} parent=1 // pred_check_branch
      %74 = sbr.rel (0) target = $region33
    $region32: #{tpu_custom_call.1} parent=1 // pred_region
      %75 = dma.done [#allocation3], 384
    $region33: #{tpu_custom_call.1} parent=1 // pred_fallthru
      _
    // Predicated region
    $region34: #{tpu_custom_call.1} parent=1 // pred_check
      _
    $region35: #{tpu_custom_call.1} parent=1 // pred_check_branch
      %77 = sbr.rel (0) target = $region37
    $region36: #{tpu_custom_call.1} parent=1 // pred_region
      %78 = dma.done [#allocation7], 384
    $region37: #{tpu_custom_call.1} parent=1 // pred_fallthru
      _
    // Predicated region
    $region38: #{tpu_custom_call.1} parent=1 // pred_check
      _
    $region39: #{tpu_custom_call.1} parent=1 // pred_check_branch
      %80 = sbr.rel (0) target = $region41
    $region40: #{tpu_custom_call.1} parent=1 // pred_region
      %81 = dma.done [#allocation7], 6144
    $region41: #{tpu_custom_call.1} parent=1 // pred_fallthru
      _
    // Predicated region
    $region42: #{tpu_custom_call.1} parent=1 // pred_check
      _
    $region43: #{tpu_custom_call.1} parent=1 // pred_check_branch
      %83 = sbr.rel (0) target = $region45
    $region44: #{tpu_custom_call.1} parent=1 // pred_region
      %84 = dma.done [#allocation10], 1536
    $region45: #{tpu_custom_call.1} parent=1 // pred_fallthru
      _
    // Predicated region
    $region46: #{tpu_custom_call.1} parent=1 // pred_check
      _
    $region47: #{tpu_custom_call.1} parent=1 // pred_check_branch
      %86 = sbr.rel (0) target = $region49
    $region48: #{tpu_custom_call.1} parent=1 // pred_region
      %87 = dma.done [#allocation5], 16
    $region49: #{tpu_custom_call.1} parent=1 // pred_fallthru
      _
    %88 = sfence
    %s89 = sld [smem:[#allocation11]]
    %s90 = sld [smem:[#allocation11 + $0x1]]
    %v91 = vld [vmem:[#allocation2] sm:$0xff]
    %v92 = vld [vmem:[#allocation2 + $0x8] sm:$0xff]
    %v93 = vld [vmem:[#allocation2 + $0x10] sm:$0xff]
    %v94 = vld [vmem:[#allocation6] sm:$0xff]
    %v95 = vld [vmem:[#allocation6 + $0x8] sm:$0xff]
    %v96 = vld [vmem:[#allocation6 + $0x10] sm:$0xff]
    %v97 = vsub.f32 %v91, %v94
    %v98 = vsub.f32 %v92, %v95
    %v99 = vsub.f32 %v93, %v96
    %v100 = vand.u32 2147483647, %v97
    %v101 = vand.u32 2147483647, %v98
    %v102 = vand.u32 2147483647, %v99
    %v106 = vcombine.high %v100, %v100
    %v107 = vcombine.high %v101, %v101
    %v108 = vcombine.high %v102, %v102
    %vm112 = vcmask 1043456
    %v113 = vsel %vm112, %v100, 0.0
    %v114 = vsel %vm112, %v106, 0.0
    %v115 = vadd.f32 %v113, %v114
    %v116 = vsel %vm112, %v101, 0.0
    %v117 = vadd.f32 %v115, %v116
    %v118 = vsel %vm112, %v107, 0.0
    %v119 = vadd.f32 %v117, %v118
    %v120 = vsel %vm112, %v102, 0.0
    %v121 = vadd.f32 %v119, %v120
    %v122 = vsel %vm112, %v108, 0.0
    %v123 = vadd.f32 %v121, %v122
    %124 = vadd.xlane.f32.xlu0 %v123
    %v125 = vpop.xlane.xlu0 %124
    %v126 = vmul.f32 %v97, %v97
    %v127 = vmul.f32 %v98, %v98
    %v128 = vmul.f32 %v99, %v99
    %v132 = vcombine.high %v126, %v126
    %v133 = vcombine.high %v127, %v127
    %v134 = vcombine.high %v128, %v128
    %v138 = vsel %vm112, %v126, 0.0
    %v139 = vsel %vm112, %v132, 0.0
    %v140 = vadd.f32 %v138, %v139
    %v141 = vsel %vm112, %v127, 0.0
    %v142 = vadd.f32 %v140, %v141
    %v143 = vsel %vm112, %v133, 0.0
    %v144 = vadd.f32 %v142, %v143
    %v145 = vsel %vm112, %v128, 0.0
    %v146 = vadd.f32 %v144, %v145
    %v147 = vsel %vm112, %v134, 0.0
    %v148 = vadd.f32 %v146, %v147
    %149 = vadd.xlane.f32.xlu0 %v148
    %v150 = vpop.xlane.xlu0 %149
    %s151 = ssub.f32 0.0, %s89
    %v152 = vstv %s151
    %v153 = vmul.f32 %v152, 1.442695
    %v154 = vpow.pop %v153
    %v155 = vadd.f32 %v125, %v150
    %v156 = vmul.f32 %v155, %v154
    %s157 = smul.f32 %s89, 768.0
    %v158 = vstv %s157
    %v159 = vadd.f32 %v156, %v158
    %v160 = vld [vmem:[%s2] sm:$0xf]
    %s161 = scalar_lea.vmem %s2, 4
    %v162 = vld [vmem:[%s161] sm:$0xf]
    %v163 = vmul.f32 %v160, %v160
    %v164 = vmul.f32 %v162, 1.442695
    %v165 = vpow.pop %v164
    %v166 = vadd.f32 %v163, %v165
    %v167 = vsub.f32 %v166, 1.0
    %v168 = vsub.f32 %v167, %v162
    %vm169 = vcmask 519168
    %v170 = vsel %vm169, %v168, 0.0
    %171 = vadd.xlane.f32.xlu0 %v170
    %v172 = vpop.xlane.xlu0 %171
    %v173 = vmul.f32 %v172, 0.5
    %v174 = vld [vmem:[#allocation8] sm:$0xff]
    %v175 = vld [vmem:[#allocation8 + $0x8] sm:$0xff]
    %v176 = vld [vmem:[#allocation8 + $0x10] sm:$0xff]
    %v177 = vld [vmem:[#allocation8 + $0x18] sm:$0xff]
    %v178 = vld [vmem:[#allocation8 + $0x20] sm:$0xff]
    %v179 = vld [vmem:[#allocation8 + $0x28] sm:$0xff]
    %v180 = vld [vmem:[#allocation8 + $0x30] sm:$0xff]
    %v181 = vld [vmem:[#allocation8 + $0x38] sm:$0xff]
    %v182 = vld [vmem:[#allocation8 + $0x40] sm:$0xff]
    %v183 = vld [vmem:[#allocation8 + $0x48] sm:$0xff]
    %v184 = vld [vmem:[#allocation8 + $0x50] sm:$0xff]
    %v185 = vld [vmem:[#allocation8 + $0x58] sm:$0xff]
    %v186 = vld [vmem:[#allocation8 + $0x60] sm:$0xff]
    %v187 = vld [vmem:[#allocation8 + $0x68] sm:$0xff]
    %v188 = vld [vmem:[#allocation8 + $0x70] sm:$0xff]
    %v189 = vld [vmem:[#allocation8 + $0x78] sm:$0xff]
    %v190 = vld [vmem:[#allocation8 + $0x80] sm:$0xff]
    %v191 = vld [vmem:[#allocation8 + $0x88] sm:$0xff]
    %v192 = vld [vmem:[#allocation8 + $0x90] sm:$0xff]
    %v193 = vld [vmem:[#allocation8 + $0x98] sm:$0xff]
    %v194 = vld [vmem:[#allocation8 + $0xa0] sm:$0xff]
    %v195 = vld [vmem:[#allocation8 + $0xa8] sm:$0xff]
    %v196 = vld [vmem:[#allocation8 + $0xb0] sm:$0xff]
    %v197 = vld [vmem:[#allocation8 + $0xb8] sm:$0xff]
    %v198 = vld [vmem:[#allocation8 + $0xc0] sm:$0xff]
    %v199 = vld [vmem:[#allocation8 + $0xc8] sm:$0xff]
    %v200 = vld [vmem:[#allocation8 + $0xd0] sm:$0xff]
    %v201 = vld [vmem:[#allocation8 + $0xd8] sm:$0xff]
    %v202 = vld [vmem:[#allocation8 + $0xe0] sm:$0xff]
    %v203 = vld [vmem:[#allocation8 + $0xe8] sm:$0xff]
    %v204 = vld [vmem:[#allocation8 + $0xf0] sm:$0xff]
    %v205 = vld [vmem:[#allocation8 + $0xf8] sm:$0xff]
    %v206 = vld [vmem:[#allocation8 + $0x100] sm:$0xff]
    %v207 = vld [vmem:[#allocation8 + $0x108] sm:$0xff]
    %v208 = vld [vmem:[#allocation8 + $0x110] sm:$0xff]
    %v209 = vld [vmem:[#allocation8 + $0x118] sm:$0xff]
    %v210 = vld [vmem:[#allocation8 + $0x120] sm:$0xff]
    %v211 = vld [vmem:[#allocation8 + $0x128] sm:$0xff]
    %v212 = vld [vmem:[#allocation8 + $0x130] sm:$0xff]
    %v213 = vld [vmem:[#allocation8 + $0x138] sm:$0xff]
    %v214 = vld [vmem:[#allocation8 + $0x140] sm:$0xff]
    %v215 = vld [vmem:[#allocation8 + $0x148] sm:$0xff]
    %v216 = vld [vmem:[#allocation8 + $0x150] sm:$0xff]
    %v217 = vld [vmem:[#allocation8 + $0x158] sm:$0xff]
    %v218 = vld [vmem:[#allocation8 + $0x160] sm:$0xff]
    %v219 = vld [vmem:[#allocation8 + $0x168] sm:$0xff]
    %v220 = vld [vmem:[#allocation8 + $0x170] sm:$0xff]
    %v221 = vld [vmem:[#allocation8 + $0x178] sm:$0xff]
    %v222 = vld [vmem:[#allocation9] sm:$0xff]
    %v223 = vld [vmem:[#allocation9 + $0x8] sm:$0xff]
    %v224 = vld [vmem:[#allocation9 + $0x10] sm:$0xff]
    %v225 = vld [vmem:[#allocation9 + $0x18] sm:$0xff]
    %v226 = vld [vmem:[#allocation9 + $0x20] sm:$0xff]
    %v227 = vld [vmem:[#allocation9 + $0x28] sm:$0xff]
    %v228 = vld [vmem:[#allocation9 + $0x30] sm:$0xff]
    %v229 = vld [vmem:[#allocation9 + $0x38] sm:$0xff]
    %v230 = vld [vmem:[#allocation9 + $0x40] sm:$0xff]
    %v231 = vld [vmem:[#allocation9 + $0x48] sm:$0xff]
    %v232 = vld [vmem:[#allocation9 + $0x50] sm:$0xff]
    %v233 = vld [vmem:[#allocation9 + $0x58] sm:$0xff]
    %v246 = vlaneseq
    %v247 = vshrl.u32 %v246, 7
    %v248 = vsub.s32 0, %v247
    %v249 = vrot.slane %v222, %v248
    %v250 = vlaneseq
    %v251 = vshrl.u32 %v250, 7
    %v252 = vsub.s32 1, %v251
    %v253 = vrot.slane %v222, %v252
    %v254 = vlaneseq
    %v255 = vshrl.u32 %v254, 7
    %v256 = vsub.s32 2, %v255
    %v257 = vrot.slane %v222, %v256
    %v258 = vlaneseq
    %v259 = vshrl.u32 %v258, 7
    %v260 = vsub.s32 3, %v259
    %v261 = vrot.slane %v222, %v260
    %v262 = vlaneseq
    %v263 = vshrl.u32 %v262, 7
    %v264 = vsub.s32 4, %v263
    %v265 = vrot.slane %v222, %v264
    %v266 = vlaneseq
    %v267 = vshrl.u32 %v266, 7
    %v268 = vsub.s32 5, %v267
    %v269 = vrot.slane %v222, %v268
    %v270 = vlaneseq
    %v271 = vshrl.u32 %v270, 7
    %v272 = vsub.s32 6, %v271
    %v273 = vrot.slane %v222, %v272
    %v274 = vlaneseq
    %v275 = vshrl.u32 %v274, 7
    %v276 = vsub.s32 7, %v275
    %v277 = vrot.slane %v222, %v276
    %v278 = vlaneseq
    %v279 = vshrl.u32 %v278, 7
    %v280 = vsub.s32 0, %v279
    %v281 = vrot.slane %v223, %v280
    %v282 = vlaneseq
    %v283 = vshrl.u32 %v282, 7
    %v284 = vsub.s32 1, %v283
    %v285 = vrot.slane %v223, %v284
    %v286 = vlaneseq
    %v287 = vshrl.u32 %v286, 7
    %v288 = vsub.s32 2, %v287
    %v289 = vrot.slane %v223, %v288
    %v290 = vlaneseq
    %v291 = vshrl.u32 %v290, 7
    %v292 = vsub.s32 3, %v291
    %v293 = vrot.slane %v223, %v292
    %v294 = vlaneseq
    %v295 = vshrl.u32 %v294, 7
    %v296 = vsub.s32 4, %v295
    %v297 = vrot.slane %v223, %v296
    %v298 = vlaneseq
    %v299 = vshrl.u32 %v298, 7
    %v300 = vsub.s32 5, %v299
    %v301 = vrot.slane %v223, %v300
    %v302 = vlaneseq
    %v303 = vshrl.u32 %v302, 7
    %v304 = vsub.s32 6, %v303
    %v305 = vrot.slane %v223, %v304
    %v306 = vlaneseq
    %v307 = vshrl.u32 %v306, 7
    %v308 = vsub.s32 7, %v307
    %v309 = vrot.slane %v223, %v308
    %v310 = vlaneseq
    %v311 = vshrl.u32 %v310, 7
    %v312 = vsub.s32 0, %v311
    %v313 = vrot.slane %v224, %v312
    %v314 = vlaneseq
    %v315 = vshrl.u32 %v314, 7
    %v316 = vsub.s32 1, %v315
    %v317 = vrot.slane %v224, %v316
    %v318 = vlaneseq
    %v319 = vshrl.u32 %v318, 7
    %v320 = vsub.s32 2, %v319
    %v321 = vrot.slane %v224, %v320
    %v322 = vlaneseq
    %v323 = vshrl.u32 %v322, 7
    %v324 = vsub.s32 3, %v323
    %v325 = vrot.slane %v224, %v324
    %v326 = vlaneseq
    %v327 = vshrl.u32 %v326, 7
    %v328 = vsub.s32 4, %v327
    %v329 = vrot.slane %v224, %v328
    %v330 = vlaneseq
    %v331 = vshrl.u32 %v330, 7
    %v332 = vsub.s32 5, %v331
    %v333 = vrot.slane %v224, %v332
    %v334 = vlaneseq
    %v335 = vshrl.u32 %v334, 7
    %v336 = vsub.s32 6, %v335
    %v337 = vrot.slane %v224, %v336
    %v338 = vlaneseq
    %v339 = vshrl.u32 %v338, 7
    %v340 = vsub.s32 7, %v339
    %v341 = vrot.slane %v224, %v340
    %v342 = vlaneseq
    %v343 = vshrl.u32 %v342, 7
    %v344 = vsub.s32 0, %v343
    %v345 = vrot.slane %v225, %v344
    %v346 = vlaneseq
    %v347 = vshrl.u32 %v346, 7
    %v348 = vsub.s32 1, %v347
    %v349 = vrot.slane %v225, %v348
    %v350 = vlaneseq
    %v351 = vshrl.u32 %v350, 7
    %v352 = vsub.s32 2, %v351
    %v353 = vrot.slane %v225, %v352
    %v354 = vlaneseq
    %v355 = vshrl.u32 %v354, 7
    %v356 = vsub.s32 3, %v355
    %v357 = vrot.slane %v225, %v356
    %v358 = vlaneseq
    %v359 = vshrl.u32 %v358, 7
    %v360 = vsub.s32 4, %v359
    %v361 = vrot.slane %v225, %v360
    %v362 = vlaneseq
    %v363 = vshrl.u32 %v362, 7
    %v364 = vsub.s32 5, %v363
    %v365 = vrot.slane %v225, %v364
    %v366 = vlaneseq
    %v367 = vshrl.u32 %v366, 7
    %v368 = vsub.s32 6, %v367
    %v369 = vrot.slane %v225, %v368
    %v370 = vlaneseq
    %v371 = vshrl.u32 %v370, 7
    %v372 = vsub.s32 7, %v371
    %v373 = vrot.slane %v225, %v372
    %v374 = vlaneseq
    %v375 = vshrl.u32 %v374, 7
    %v376 = vsub.s32 0, %v375
    %v377 = vrot.slane %v226, %v376
    %v378 = vlaneseq
    %v379 = vshrl.u32 %v378, 7
    %v380 = vsub.s32 1, %v379
    %v381 = vrot.slane %v226, %v380
    %v382 = vlaneseq
    %v383 = vshrl.u32 %v382, 7
    %v384 = vsub.s32 2, %v383
    %v385 = vrot.slane %v226, %v384
    %v386 = vlaneseq
    %v387 = vshrl.u32 %v386, 7
    %v388 = vsub.s32 3, %v387
    %v389 = vrot.slane %v226, %v388
    %v390 = vlaneseq
    %v391 = vshrl.u32 %v390, 7
    %v392 = vsub.s32 4, %v391
    %v393 = vrot.slane %v226, %v392
    %v394 = vlaneseq
    %v395 = vshrl.u32 %v394, 7
    %v396 = vsub.s32 5, %v395
    %v397 = vrot.slane %v226, %v396
    %v398 = vlaneseq
    %v399 = vshrl.u32 %v398, 7
    %v400 = vsub.s32 6, %v399
    %v401 = vrot.slane %v226, %v400
    %v402 = vlaneseq
    %v403 = vshrl.u32 %v402, 7
    %v404 = vsub.s32 7, %v403
    %v405 = vrot.slane %v226, %v404
    %v406 = vlaneseq
    %v407 = vshrl.u32 %v406, 7
    %v408 = vsub.s32 0, %v407
    %v409 = vrot.slane %v227, %v408
    %v410 = vlaneseq
    %v411 = vshrl.u32 %v410, 7
    %v412 = vsub.s32 1, %v411
    %v413 = vrot.slane %v227, %v412
    %v414 = vlaneseq
    %v415 = vshrl.u32 %v414, 7
    %v416 = vsub.s32 2, %v415
    %v417 = vrot.slane %v227, %v416
    %v418 = vlaneseq
    %v419 = vshrl.u32 %v418, 7
    %v420 = vsub.s32 3, %v419
    %v421 = vrot.slane %v227, %v420
    %v422 = vlaneseq
    %v423 = vshrl.u32 %v422, 7
    %v424 = vsub.s32 4, %v423
    %v425 = vrot.slane %v227, %v424
    %v426 = vlaneseq
    %v427 = vshrl.u32 %v426, 7
    %v428 = vsub.s32 5, %v427
    %v429 = vrot.slane %v227, %v428
    %v430 = vlaneseq
    %v431 = vshrl.u32 %v430, 7
    %v432 = vsub.s32 6, %v431
    %v433 = vrot.slane %v227, %v432
    %v434 = vlaneseq
    %v435 = vshrl.u32 %v434, 7
    %v436 = vsub.s32 7, %v435
    %v437 = vrot.slane %v227, %v436
    %v438 = vlaneseq
    %v439 = vshrl.u32 %v438, 7
    %v440 = vsub.s32 0, %v439
    %v441 = vrot.slane %v228, %v440
    %v442 = vlaneseq
    %v443 = vshrl.u32 %v442, 7
    %v444 = vsub.s32 1, %v443
    %v445 = vrot.slane %v228, %v444
    %v446 = vlaneseq
    %v447 = vshrl.u32 %v446, 7
    %v448 = vsub.s32 2, %v447
    %v449 = vrot.slane %v228, %v448
    %v450 = vlaneseq
    %v451 = vshrl.u32 %v450, 7
    %v452 = vsub.s32 3, %v451
    %v453 = vrot.slane %v228, %v452
    %v454 = vlaneseq
    %v455 = vshrl.u32 %v454, 7
    %v456 = vsub.s32 4, %v455
    %v457 = vrot.slane %v228, %v456
    %v458 = vlaneseq
    %v459 = vshrl.u32 %v458, 7
    %v460 = vsub.s32 5, %v459
    %v461 = vrot.slane %v228, %v460
    %v462 = vlaneseq
    %v463 = vshrl.u32 %v462, 7
    %v464 = vsub.s32 6, %v463
    %v465 = vrot.slane %v228, %v464
    %v466 = vlaneseq
    %v467 = vshrl.u32 %v466, 7
    %v468 = vsub.s32 7, %v467
    %v469 = vrot.slane %v228, %v468
    %v470 = vlaneseq
    %v471 = vshrl.u32 %v470, 7
    %v472 = vsub.s32 0, %v471
    %v473 = vrot.slane %v229, %v472
    %v474 = vlaneseq
    %v475 = vshrl.u32 %v474, 7
    %v476 = vsub.s32 1, %v475
    %v477 = vrot.slane %v229, %v476
    %v478 = vlaneseq
    %v479 = vshrl.u32 %v478, 7
    %v480 = vsub.s32 2, %v479
    %v481 = vrot.slane %v229, %v480
    %v482 = vlaneseq
    %v483 = vshrl.u32 %v482, 7
    %v484 = vsub.s32 3, %v483
    %v485 = vrot.slane %v229, %v484
    %v486 = vlaneseq
    %v487 = vshrl.u32 %v486, 7
    %v488 = vsub.s32 4, %v487
    %v489 = vrot.slane %v229, %v488
    %v490 = vlaneseq
    %v491 = vshrl.u32 %v490, 7
    %v492 = vsub.s32 5, %v491
    %v493 = vrot.slane %v229, %v492
    %v494 = vlaneseq
    %v495 = vshrl.u32 %v494, 7
    %v496 = vsub.s32 6, %v495
    %v497 = vrot.slane %v229, %v496
    %v498 = vlaneseq
    %v499 = vshrl.u32 %v498, 7
    %v500 = vsub.s32 7, %v499
    %v501 = vrot.slane %v229, %v500
    %v502 = vlaneseq
    %v503 = vshrl.u32 %v502, 7
    %v504 = vsub.s32 0, %v503
    %v505 = vrot.slane %v230, %v504
    %v506 = vlaneseq
    %v507 = vshrl.u32 %v506, 7
    %v508 = vsub.s32 1, %v507
    %v509 = vrot.slane %v230, %v508
    %v510 = vlaneseq
    %v511 = vshrl.u32 %v510, 7
    %v512 = vsub.s32 2, %v511
    %v513 = vrot.slane %v230, %v512
    %v514 = vlaneseq
    %v515 = vshrl.u32 %v514, 7
    %v516 = vsub.s32 3, %v515
    %v517 = vrot.slane %v230, %v516
    %v518 = vlaneseq
    %v519 = vshrl.u32 %v518, 7
    %v520 = vsub.s32 4, %v519
    %v521 = vrot.slane %v230, %v520
    %v522 = vlaneseq
    %v523 = vshrl.u32 %v522, 7
    %v524 = vsub.s32 5, %v523
    %v525 = vrot.slane %v230, %v524
    %v526 = vlaneseq
    %v527 = vshrl.u32 %v526, 7
    %v528 = vsub.s32 6, %v527
    %v529 = vrot.slane %v230, %v528
    %v530 = vlaneseq
    %v531 = vshrl.u32 %v530, 7
    %v532 = vsub.s32 7, %v531
    %v533 = vrot.slane %v230, %v532
    %v534 = vlaneseq
    %v535 = vshrl.u32 %v534, 7
    %v536 = vsub.s32 0, %v535
    %v537 = vrot.slane %v231, %v536
    %v538 = vlaneseq
    %v539 = vshrl.u32 %v538, 7
    %v540 = vsub.s32 1, %v539
    %v541 = vrot.slane %v231, %v540
    %v542 = vlaneseq
    %v543 = vshrl.u32 %v542, 7
    %v544 = vsub.s32 2, %v543
    %v545 = vrot.slane %v231, %v544
    %v546 = vlaneseq
    %v547 = vshrl.u32 %v546, 7
    %v548 = vsub.s32 3, %v547
    %v549 = vrot.slane %v231, %v548
    %v550 = vlaneseq
    %v551 = vshrl.u32 %v550, 7
    %v552 = vsub.s32 4, %v551
    %v553 = vrot.slane %v231, %v552
    %v554 = vlaneseq
    %v555 = vshrl.u32 %v554, 7
    %v556 = vsub.s32 5, %v555
    %v557 = vrot.slane %v231, %v556
    %v558 = vlaneseq
    %v559 = vshrl.u32 %v558, 7
    %v560 = vsub.s32 6, %v559
    %v561 = vrot.slane %v231, %v560
    %v562 = vlaneseq
    %v563 = vshrl.u32 %v562, 7
    %v564 = vsub.s32 7, %v563
    %v565 = vrot.slane %v231, %v564
    %v566 = vlaneseq
    %v567 = vshrl.u32 %v566, 7
    %v568 = vsub.s32 0, %v567
    %v569 = vrot.slane %v232, %v568
    %v570 = vlaneseq
    %v571 = vshrl.u32 %v570, 7
    %v572 = vsub.s32 1, %v571
    %v573 = vrot.slane %v232, %v572
    %v574 = vlaneseq
    %v575 = vshrl.u32 %v574, 7
    %v576 = vsub.s32 2, %v575
    %v577 = vrot.slane %v232, %v576
    %v578 = vlaneseq
    %v579 = vshrl.u32 %v578, 7
    %v580 = vsub.s32 3, %v579
    %v581 = vrot.slane %v232, %v580
    %v582 = vlaneseq
    %v583 = vshrl.u32 %v582, 7
    %v584 = vsub.s32 4, %v583
    %v585 = vrot.slane %v232, %v584
    %v586 = vlaneseq
    %v587 = vshrl.u32 %v586, 7
    %v588 = vsub.s32 5, %v587
    %v589 = vrot.slane %v232, %v588
    %v590 = vlaneseq
    %v591 = vshrl.u32 %v590, 7
    %v592 = vsub.s32 6, %v591
    %v593 = vrot.slane %v232, %v592
    %v594 = vlaneseq
    %v595 = vshrl.u32 %v594, 7
    %v596 = vsub.s32 7, %v595
    %v597 = vrot.slane %v232, %v596
    %v598 = vlaneseq
    %v599 = vshrl.u32 %v598, 7
    %v600 = vsub.s32 0, %v599
    %v601 = vrot.slane %v233, %v600
    %v602 = vlaneseq
    %v603 = vshrl.u32 %v602, 7
    %v604 = vsub.s32 1, %v603
    %v605 = vrot.slane %v233, %v604
    %v606 = vlaneseq
    %v607 = vshrl.u32 %v606, 7
    %v608 = vsub.s32 2, %v607
    %v609 = vrot.slane %v233, %v608
    %v610 = vlaneseq
    %v611 = vshrl.u32 %v610, 7
    %v612 = vsub.s32 3, %v611
    %v613 = vrot.slane %v233, %v612
    %v614 = vlaneseq
    %v615 = vshrl.u32 %v614, 7
    %v616 = vsub.s32 4, %v615
    %v617 = vrot.slane %v233, %v616
    %v618 = vlaneseq
    %v619 = vshrl.u32 %v618, 7
    %v620 = vsub.s32 5, %v619
    %v621 = vrot.slane %v233, %v620
    %v622 = vlaneseq
    %v623 = vshrl.u32 %v622, 7
    %v624 = vsub.s32 6, %v623
    %v625 = vrot.slane %v233, %v624
    %v626 = vlaneseq
    %v627 = vshrl.u32 %v626, 7
    %v628 = vsub.s32 7, %v627
    %v629 = vrot.slane %v233, %v628
    %v630 = vcombine.low %v249, %v253
    %v631 = vcombine.low %v257, %v261
    %v632 = vcombine.low %v265, %v269
    %v633 = vcombine.low %v273, %v277
    %v634 = vcombine.low %v281, %v285
    %v635 = vcombine.low %v289, %v293
    %v636 = vcombine.low %v297, %v301
    %v637 = vcombine.low %v305, %v309
    %v638 = vcombine.low %v313, %v317
    %v639 = vcombine.low %v321, %v325
    %v640 = vcombine.low %v329, %v333
    %v641 = vcombine.low %v337, %v341
    %v642 = vcombine.low %v345, %v349
    %v643 = vcombine.low %v353, %v357
    %v644 = vcombine.low %v361, %v365
    %v645 = vcombine.low %v369, %v373
    %v646 = vcombine.low %v377, %v381
    %v647 = vcombine.low %v385, %v389
    %v648 = vcombine.low %v393, %v397
    %v649 = vcombine.low %v401, %v405
    %v650 = vcombine.low %v409, %v413
    %v651 = vcombine.low %v417, %v421
    %v652 = vcombine.low %v425, %v429
    %v653 = vcombine.low %v433, %v437
    %v654 = vcombine.low %v441, %v445
    %v655 = vcombine.low %v449, %v453
    %v656 = vcombine.low %v457, %v461
    %v657 = vcombine.low %v465, %v469
    %v658 = vcombine.low %v473, %v477
    %v659 = vcombine.low %v481, %v485
    %v660 = vcombine.low %v489, %v493
    %v661 = vcombine.low %v497, %v501
    %v662 = vcombine.low %v505, %v509
    %v663 = vcombine.low %v513, %v517
    %v664 = vcombine.low %v521, %v525
    %v665 = vcombine.low %v529, %v533
    %v666 = vcombine.low %v537, %v541
    %v667 = vcombine.low %v545, %v549
    %v668 = vcombine.low %v553, %v557
    %v669 = vcombine.low %v561, %v565
    %v670 = vcombine.low %v569, %v573
    %v671 = vcombine.low %v577, %v581
    %v672 = vcombine.low %v585, %v589
    %v673 = vcombine.low %v593, %v597
    %v674 = vcombine.low %v601, %v605
    %v675 = vcombine.low %v609, %v613
    %v676 = vcombine.low %v617, %v621
    %v677 = vcombine.low %v625, %v629
    %v726 = vmul.f32 %v174, %v630
    %v727 = vmul.f32 %v175, %v631
    %v728 = vmul.f32 %v176, %v632
    %v729 = vmul.f32 %v177, %v633
    %v730 = vmul.f32 %v178, %v634
    %v731 = vmul.f32 %v179, %v635
    %v732 = vmul.f32 %v180, %v636
    %v733 = vmul.f32 %v181, %v637
    %v734 = vmul.f32 %v182, %v638
    %v735 = vmul.f32 %v183, %v639
    %v736 = vmul.f32 %v184, %v640
    %v737 = vmul.f32 %v185, %v641
    %v738 = vmul.f32 %v186, %v642
    %v739 = vmul.f32 %v187, %v643
    %v740 = vmul.f32 %v188, %v644
    %v741 = vmul.f32 %v189, %v645
    %v742 = vmul.f32 %v190, %v646
    %v743 = vmul.f32 %v191, %v647
    %v744 = vmul.f32 %v192, %v648
    %v745 = vmul.f32 %v193, %v649
    %v746 = vmul.f32 %v194, %v650
    %v747 = vmul.f32 %v195, %v651
    %v748 = vmul.f32 %v196, %v652
    %v749 = vmul.f32 %v197, %v653
    %v750 = vmul.f32 %v198, %v654
    %v751 = vmul.f32 %v199, %v655
    %v752 = vmul.f32 %v200, %v656
    %v753 = vmul.f32 %v201, %v657
    %v754 = vmul.f32 %v202, %v658
    %v755 = vmul.f32 %v203, %v659
    %v756 = vmul.f32 %v204, %v660
    %v757 = vmul.f32 %v205, %v661
    %v758 = vmul.f32 %v206, %v662
    %v759 = vmul.f32 %v207, %v663
    %v760 = vmul.f32 %v208, %v664
    %v761 = vmul.f32 %v209, %v665
    %v762 = vmul.f32 %v210, %v666
    %v763 = vmul.f32 %v211, %v667
    %v764 = vmul.f32 %v212, %v668
    %v765 = vmul.f32 %v213, %v669
    %v766 = vmul.f32 %v214, %v670
    %v767 = vmul.f32 %v215, %v671
    %v768 = vmul.f32 %v216, %v672
    %v769 = vmul.f32 %v217, %v673
    %v770 = vmul.f32 %v218, %v674
    %v771 = vmul.f32 %v219, %v675
    %v772 = vmul.f32 %v220, %v676
    %v773 = vmul.f32 %v221, %v677
    %v822 = vcombine.high %v726, %v726
    %v823 = vcombine.high %v727, %v727
    %v824 = vcombine.high %v728, %v728
    %v825 = vcombine.high %v729, %v729
    %v826 = vcombine.high %v730, %v730
    %v827 = vcombine.high %v731, %v731
    %v828 = vcombine.high %v732, %v732
    %v829 = vcombine.high %v733, %v733
    %v830 = vcombine.high %v734, %v734
    %v831 = vcombine.high %v735, %v735
    %v832 = vcombine.high %v736, %v736
    %v833 = vcombine.high %v737, %v737
    %v834 = vcombine.high %v738, %v738
    %v835 = vcombine.high %v739, %v739
    %v836 = vcombine.high %v740, %v740
    %v837 = vcombine.high %v741, %v741
    %v838 = vcombine.high %v742, %v742
    %v839 = vcombine.high %v743, %v743
    %v840 = vcombine.high %v744, %v744
    %v841 = vcombine.high %v745, %v745
    %v842 = vcombine.high %v746, %v746
    %v843 = vcombine.high %v747, %v747
    %v844 = vcombine.high %v748, %v748
    %v845 = vcombine.high %v749, %v749
    %v846 = vcombine.high %v750, %v750
    %v847 = vcombine.high %v751, %v751
    %v848 = vcombine.high %v752, %v752
    %v849 = vcombine.high %v753, %v753
    %v850 = vcombine.high %v754, %v754
    %v851 = vcombine.high %v755, %v755
    %v852 = vcombine.high %v756, %v756
    %v853 = vcombine.high %v757, %v757
    %v854 = vcombine.high %v758, %v758
    %v855 = vcombine.high %v759, %v759
    %v856 = vcombine.high %v760, %v760
    %v857 = vcombine.high %v761, %v761
    %v858 = vcombine.high %v762, %v762
    %v859 = vcombine.high %v763, %v763
    %v860 = vcombine.high %v764, %v764
    %v861 = vcombine.high %v765, %v765
    %v862 = vcombine.high %v766, %v766
    %v863 = vcombine.high %v767, %v767
    %v864 = vcombine.high %v768, %v768
    %v865 = vcombine.high %v769, %v769
    %v866 = vcombine.high %v770, %v770
    %v867 = vcombine.high %v771, %v771
    %v868 = vcombine.high %v772, %v772
    %v869 = vcombine.high %v773, %v773
    %v918 = vsel %vm112, %v726, 0.0
    %v919 = vsel %vm112, %v822, 0.0
    %v920 = vadd.f32 %v918, %v919
    %v921 = vsel %vm112, %v727, 0.0
    %v922 = vadd.f32 %v920, %v921
    %v923 = vsel %vm112, %v823, 0.0
    %v924 = vadd.f32 %v922, %v923
    %v925 = vsel %vm112, %v728, 0.0
    %v926 = vadd.f32 %v924, %v925
    %v927 = vsel %vm112, %v824, 0.0
    %v928 = vadd.f32 %v926, %v927
    %v929 = vsel %vm112, %v729, 0.0
    %v930 = vadd.f32 %v928, %v929
    %v931 = vsel %vm112, %v825, 0.0
    %v932 = vadd.f32 %v930, %v931
    %v933 = vsel %vm112, %v730, 0.0
    %v934 = vadd.f32 %v932, %v933
    %v935 = vsel %vm112, %v826, 0.0
    %v936 = vadd.f32 %v934, %v935
    %v937 = vsel %vm112, %v731, 0.0
    %v938 = vadd.f32 %v936, %v937
    %v939 = vsel %vm112, %v827, 0.0
    %v940 = vadd.f32 %v938, %v939
    %v941 = vsel %vm112, %v732, 0.0
    %v942 = vadd.f32 %v940, %v941
    %v943 = vsel %vm112, %v828, 0.0
    %v944 = vadd.f32 %v942, %v943
    %v945 = vsel %vm112, %v733, 0.0
    %v946 = vadd.f32 %v944, %v945
    %v947 = vsel %vm112, %v829, 0.0
    %v948 = vadd.f32 %v946, %v947
    %v949 = vsel %vm112, %v734, 0.0
    %v950 = vadd.f32 %v948, %v949
    %v951 = vsel %vm112, %v830, 0.0
    %v952 = vadd.f32 %v950, %v951
    %v953 = vsel %vm112, %v735, 0.0
    %v954 = vadd.f32 %v952, %v953
    %v955 = vsel %vm112, %v831, 0.0
    %v956 = vadd.f32 %v954, %v955
    %v957 = vsel %vm112, %v736, 0.0
    %v958 = vadd.f32 %v956, %v957
    %v959 = vsel %vm112, %v832, 0.0
    %v960 = vadd.f32 %v958, %v959
    %v961 = vsel %vm112, %v737, 0.0
    %v962 = vadd.f32 %v960, %v961
    %v963 = vsel %vm112, %v833, 0.0
    %v964 = vadd.f32 %v962, %v963
    %v965 = vsel %vm112, %v738, 0.0
    %v966 = vadd.f32 %v964, %v965
    %v967 = vsel %vm112, %v834, 0.0
    %v968 = vadd.f32 %v966, %v967
    %v969 = vsel %vm112, %v739, 0.0
    %v970 = vadd.f32 %v968, %v969
    %v971 = vsel %vm112, %v835, 0.0
    %v972 = vadd.f32 %v970, %v971
    %v973 = vsel %vm112, %v740, 0.0
    %v974 = vadd.f32 %v972, %v973
    %v975 = vsel %vm112, %v836, 0.0
    %v976 = vadd.f32 %v974, %v975
    %v977 = vsel %vm112, %v741, 0.0
    %v978 = vadd.f32 %v976, %v977
    %v979 = vsel %vm112, %v837, 0.0
    %v980 = vadd.f32 %v978, %v979
    %v981 = vsel %vm112, %v742, 0.0
    %v982 = vadd.f32 %v980, %v981
    %v983 = vsel %vm112, %v838, 0.0
    %v984 = vadd.f32 %v982, %v983
    %v985 = vsel %vm112, %v743, 0.0
    %v986 = vadd.f32 %v984, %v985
    %v987 = vsel %vm112, %v839, 0.0
    %v988 = vadd.f32 %v986, %v987
    %v989 = vsel %vm112, %v744, 0.0
    %v990 = vadd.f32 %v988, %v989
    %v991 = vsel %vm112, %v840, 0.0
    %v992 = vadd.f32 %v990, %v991
    %v993 = vsel %vm112, %v745, 0.0
    %v994 = vadd.f32 %v992, %v993
    %v995 = vsel %vm112, %v841, 0.0
    %v996 = vadd.f32 %v994, %v995
    %v997 = vsel %vm112, %v746, 0.0
    %v998 = vadd.f32 %v996, %v997
    %v999 = vsel %vm112, %v842, 0.0
    %v1000 = vadd.f32 %v998, %v999
    %v1001 = vsel %vm112, %v747, 0.0
    %v1002 = vadd.f32 %v1000, %v1001
    %v1003 = vsel %vm112, %v843, 0.0
    %v1004 = vadd.f32 %v1002, %v1003
    %v1005 = vsel %vm112, %v748, 0.0
    %v1006 = vadd.f32 %v1004, %v1005
    %v1007 = vsel %vm112, %v844, 0.0
    %v1008 = vadd.f32 %v1006, %v1007
    %v1009 = vsel %vm112, %v749, 0.0
    %v1010 = vadd.f32 %v1008, %v1009
    %v1011 = vsel %vm112, %v845, 0.0
    %v1012 = vadd.f32 %v1010, %v1011
    %v1013 = vsel %vm112, %v750, 0.0
    %v1014 = vadd.f32 %v1012, %v1013
    %v1015 = vsel %vm112, %v846, 0.0
    %v1016 = vadd.f32 %v1014, %v1015
    %v1017 = vsel %vm112, %v751, 0.0
    %v1018 = vadd.f32 %v1016, %v1017
    %v1019 = vsel %vm112, %v847, 0.0
    %v1020 = vadd.f32 %v1018, %v1019
    %v1021 = vsel %vm112, %v752, 0.0
    %v1022 = vadd.f32 %v1020, %v1021
    %v1023 = vsel %vm112, %v848, 0.0
    %v1024 = vadd.f32 %v1022, %v1023
    %v1025 = vsel %vm112, %v753, 0.0
    %v1026 = vadd.f32 %v1024, %v1025
    %v1027 = vsel %vm112, %v849, 0.0
    %v1028 = vadd.f32 %v1026, %v1027
    %v1029 = vsel %vm112, %v754, 0.0
    %v1030 = vadd.f32 %v1028, %v1029
    %v1031 = vsel %vm112, %v850, 0.0
    %v1032 = vadd.f32 %v1030, %v1031
    %v1033 = vsel %vm112, %v755, 0.0
    %v1034 = vadd.f32 %v1032, %v1033
    %v1035 = vsel %vm112, %v851, 0.0
    %v1036 = vadd.f32 %v1034, %v1035
    %v1037 = vsel %vm112, %v756, 0.0
    %v1038 = vadd.f32 %v1036, %v1037
    %v1039 = vsel %vm112, %v852, 0.0
    %v1040 = vadd.f32 %v1038, %v1039
    %v1041 = vsel %vm112, %v757, 0.0
    %v1042 = vadd.f32 %v1040, %v1041
    %v1043 = vsel %vm112, %v853, 0.0
    %v1044 = vadd.f32 %v1042, %v1043
    %v1045 = vsel %vm112, %v758, 0.0
    %v1046 = vadd.f32 %v1044, %v1045
    %v1047 = vsel %vm112, %v854, 0.0
    %v1048 = vadd.f32 %v1046, %v1047
    %v1049 = vsel %vm112, %v759, 0.0
    %v1050 = vadd.f32 %v1048, %v1049
    %v1051 = vsel %vm112, %v855, 0.0
    %v1052 = vadd.f32 %v1050, %v1051
    %v1053 = vsel %vm112, %v760, 0.0
    %v1054 = vadd.f32 %v1052, %v1053
    %v1055 = vsel %vm112, %v856, 0.0
    %v1056 = vadd.f32 %v1054, %v1055
    %v1057 = vsel %vm112, %v761, 0.0
    %v1058 = vadd.f32 %v1056, %v1057
    %v1059 = vsel %vm112, %v857, 0.0
    %v1060 = vadd.f32 %v1058, %v1059
    %v1061 = vsel %vm112, %v762, 0.0
    %v1062 = vadd.f32 %v1060, %v1061
    %v1063 = vsel %vm112, %v858, 0.0
    %v1064 = vadd.f32 %v1062, %v1063
    %v1065 = vsel %vm112, %v763, 0.0
    %v1066 = vadd.f32 %v1064, %v1065
    %v1067 = vsel %vm112, %v859, 0.0
    %v1068 = vadd.f32 %v1066, %v1067
    %v1069 = vsel %vm112, %v764, 0.0
    %v1070 = vadd.f32 %v1068, %v1069
    %v1071 = vsel %vm112, %v860, 0.0
    %v1072 = vadd.f32 %v1070, %v1071
    %v1073 = vsel %vm112, %v765, 0.0
    %v1074 = vadd.f32 %v1072, %v1073
    %v1075 = vsel %vm112, %v861, 0.0
    %v1076 = vadd.f32 %v1074, %v1075
    %v1077 = vsel %vm112, %v766, 0.0
    %v1078 = vadd.f32 %v1076, %v1077
    %v1079 = vsel %vm112, %v862, 0.0
    %v1080 = vadd.f32 %v1078, %v1079
    %v1081 = vsel %vm112, %v767, 0.0
    %v1082 = vadd.f32 %v1080, %v1081
    %v1083 = vsel %vm112, %v863, 0.0
    %v1084 = vadd.f32 %v1082, %v1083
    %v1085 = vsel %vm112, %v768, 0.0
    %v1086 = vadd.f32 %v1084, %v1085
    %v1087 = vsel %vm112, %v864, 0.0
    %v1088 = vadd.f32 %v1086, %v1087
    %v1089 = vsel %vm112, %v769, 0.0
    %v1090 = vadd.f32 %v1088, %v1089
    %v1091 = vsel %vm112, %v865, 0.0
    %v1092 = vadd.f32 %v1090, %v1091
    %v1093 = vsel %vm112, %v770, 0.0
    %v1094 = vadd.f32 %v1092, %v1093
    %v1095 = vsel %vm112, %v866, 0.0
    %v1096 = vadd.f32 %v1094, %v1095
    %v1097 = vsel %vm112, %v771, 0.0
    %v1098 = vadd.f32 %v1096, %v1097
    %v1099 = vsel %vm112, %v867, 0.0
    %v1100 = vadd.f32 %v1098, %v1099
    %v1101 = vsel %vm112, %v772, 0.0
    %v1102 = vadd.f32 %v1100, %v1101
    %v1103 = vsel %vm112, %v868, 0.0
    %v1104 = vadd.f32 %v1102, %v1103
    %v1105 = vsel %vm112, %v773, 0.0
    %v1106 = vadd.f32 %v1104, %v1105
    %v1107 = vsel %vm112, %v869, 0.0
    %v1108 = vadd.f32 %v1106, %v1107
    %1109 = vadd.xlane.f32.xlu0 %v1108
    %v1110 = vpop.xlane.xlu0 %1109
    %v1111 = vmul.f32 %v1110, 0.0625
    %v1112 = vstv %s90
    %v1113 = vadd.f32 %v1111, %v1112
    %vm1114 = vcmask 3072
    %1115 = vst.msk [vmem:[%s7] sm:$0xf] %vm1114, %v1113
    %v1116 = vld [vmem:[%s5] sm:$0xf]
    %vm1117 = vcmp.eq.s32.totalorder %v1116, 0
    %v1118 = vsel %vm1117, 1.0, 0.0
    %v1119 = vsel %vm1114, %v1118, 0.0
    %v1120 = vrot.slane %v1119, 4
    %v1121 = vadd.f32 %v1119, %v1120
    %v1122 = vrot.slane %v1121, 2
    %v1123 = vadd.f32 %v1121, %v1122
    %v1124 = vrot.slane %v1123, 1
    %v1125 = vadd.f32 %v1123, %v1124
    %v1126 = vrcp.pop %v1125
    %v1127 = vmul.f32 1.0, %v1126
    %v1128 = vmul.f32 %v1118, %v159
    %v1129 = vsel %vm1114, %v1128, 0.0
    %v1130 = vrot.slane %v1129, 4
    %v1131 = vadd.f32 %v1129, %v1130
    %v1132 = vrot.slane %v1131, 2
    %v1133 = vadd.f32 %v1131, %v1132
    %v1134 = vrot.slane %v1133, 1
    %v1135 = vadd.f32 %v1133, %v1134
    %v1136 = vmul.f32 %v1135, %v1127
    %v1137 = vmul.f32 %v1118, %v173
    %v1138 = vsel %vm1114, %v1137, 0.0
    %v1139 = vrot.slane %v1138, 4
    %v1140 = vadd.f32 %v1138, %v1139
    %v1141 = vrot.slane %v1140, 2
    %v1142 = vadd.f32 %v1140, %v1141
    %v1143 = vrot.slane %v1142, 1
    %v1144 = vadd.f32 %v1142, %v1143
    %v1145 = vmul.f32 %v1144, %v1127
    %v1146 = vmul.f32 %v1145, 1e-06
    %1148 = vrot.lane.b32.xlu0 %v1146, 1
    %v1149 = vpop.permute.xlu0 %1148
    %vm1151 = vcmask 7168
    %v1152 = vsel %vm1151, %v1136, %v1149
    %vm1153 = vcmask 8192
    %1154 = vst.msk [vmem:[#allocation12] sm:$0x1] %vm1153, %v1152
    // Predicated region
    $region50: #{tpu_custom_call.1} parent=1 // pred_check
      _
    $region51: #{tpu_custom_call.1} parent=1 // pred_check_branch
      %1156 = sbr.rel (0) target = $region53
    $region52: #{tpu_custom_call.1} parent=1 // pred_region
      _
    $region53: #{tpu_custom_call.1} parent=1 // pred_fallthru
      _
    // Predicated region
    $region54: #{tpu_custom_call.1} parent=1 // pred_check
      _
    $region55: #{tpu_custom_call.1} parent=1 // pred_check_branch
      %1158 = sbr.rel (0) target = $region57
    $region56: #{tpu_custom_call.1} parent=1 // pred_region
      %s1160 = ssub.s32 16, 16
      %1161 = vsyncadd [#allocation4], %s1160
      %s1163 = sshll.u32 [#allocation12], 4
      %s1164 = int_to_ptr.vmem [resolvable:$true] %s1163
      %1166 = dma.vmem_to_hbm [thread:$0]  %s1164, 16, %s8, [#allocation4]
    $region57: #{tpu_custom_call.1} parent=1 // pred_fallthru
      _
    // Predicated region
    $region58: #{tpu_custom_call.1} parent=1 // pred_check
      _
    $region59: #{tpu_custom_call.1} parent=1 // pred_check_branch
      %1168 = sbr.rel (0) target = $region61
    $region60: #{tpu_custom_call.1} parent=1 // pred_region
      _
    $region61: #{tpu_custom_call.1} parent=1 // pred_fallthru
      _
    // Predicated region
    $region62: #{tpu_custom_call.1} parent=1 // pred_check
      _
    $region63: #{tpu_custom_call.1} parent=1 // pred_check_branch
      %1170 = sbr.rel (0) target = $region65
    $region64: #{tpu_custom_call.1} parent=1 // pred_region
      %1171 = dma.done [#allocation4], 16
    $region65: #{tpu_custom_call.1} parent=1 // pred_fallthru
      _
    %1172 = vsyncpa [#allocation3], 1
    %1173 = vsyncpa [#allocation7], 1
    %1174 = vsyncpa [#allocation10], 1
    %1175 = vsyncpa [#allocation4], 1
    %1176 = vsyncpa [#allocation5], 1

</llo_original>
